<compile_context>
chip_gen: v7x
topology: tpu7x:2x2x1
jax: 0.10.0
libtpu: 0.0.40
codegen_flags: <defaults>
</compile_context>

<pallas_src>
import functools

import jax
import jax.numpy as jnp
from jax.experimental import pallas as pl
from jax.experimental.pallas import tpu as pltpu


def _round_up(x: int, m: int) -> int:
    return ((x + m - 1) // m) * m


def _make_ce_kernel(n_valid: int, tn: int, tc: int):
    """Cross-entropy kernel over a (N-tiles, C-tiles) grid with online LSE."""

    def kernel(logits_ref, targets_ref, partial_ref, m_sc, l_sc, t_sc):
        ni = pl.program_id(0)
        ci = pl.program_id(1)
        n_cblocks = pl.num_programs(1)

        @pl.when(ci == 0)
        def _():
            m_sc[...] = jnp.full_like(m_sc, -jnp.inf)
            l_sc[...] = jnp.zeros_like(l_sc)
            t_sc[...] = jnp.zeros_like(t_sc)

        # Upcast to f32 only inside the kernel (VPU-cheap; required on v5e
        # whose VPU/EUP have no bf16 path).
        x = logits_ref[...].astype(jnp.float32)          # (tn, tc)
        tgt = targets_ref[...]                           # (tn, 1) int32

        # Online log-sum-exp update for this class tile.
        blk_max = jnp.max(x, axis=-1, keepdims=True)     # (tn, 1)
        m_new = jnp.maximum(m_sc[...], blk_max)
        alpha = jnp.exp(m_sc[...] - m_new)
        l_sc[...] = alpha * l_sc[...] + jnp.sum(
            jnp.exp(x - m_new), axis=-1, keepdims=True)
        m_sc[...] = m_new

        # Gather logits[i, targets[i]] restricted to this class tile via a
        # one-hot compare against the *global* class index (no dynamic
        # gather on TPU).  Exactly one class tile contributes per row.
        col = jax.lax.broadcasted_iota(jnp.int32, x.shape, 1) + ci * tc
        t_sc[...] += jnp.sum(
            jnp.where(col == tgt, x, 0.0), axis=-1, keepdims=True)

        @pl.when(ci == n_cblocks - 1)
        def _():
            lse = m_sc[...] + jnp.log(l_sc[...])         # (tn, 1)
            per_ex = lse - t_sc[...]                     # -log_softmax[target]
            # Mask rows that are padding (global row >= n_valid).
            row = jax.lax.broadcasted_iota(jnp.int32, per_ex.shape, 0) + ni * tn
            per_ex = jnp.where(row < n_valid, per_ex, 0.0)
            s = jnp.sum(per_ex)                          # scalar partial sum
            # Lane-dense store: replicate the scalar over a full (1,8,128)
            # block so the store path is unmasked.
            partial_ref[...] = jnp.broadcast_to(s, partial_ref.shape)

    return kernel


@functools.partial(jax.jit, static_argnames=("tn", "tc"))
def cross_entropy_loss(logits: jax.Array, targets: jax.Array,
                       *, tn: int = 256, tc: int = 2048) -> jax.Array:
    """Mean cross-entropy, semantics of torch.nn.CrossEntropyLoss()."""
    n, c = logits.shape
    dtype = logits.dtype

    # Tile sizes: rows multiple of 8, classes multiple of 128.
    tn = min(tn, _round_up(n, 8))
    tc = min(tc, _round_up(c, 128))
    n_pad = _round_up(n, tn)
    c_pad = _round_up(c, tc)

    x = logits
    if c_pad != c:
        # Pad classes with a very negative value -> exp(.) == 0 contribution.
        neg = float(jnp.finfo(dtype).min)
        x = jnp.pad(x, ((0, 0), (0, c_pad - c)), constant_values=neg)
    if n_pad != n:
        x = jnp.pad(x, ((0, n_pad - n), (0, 0)))

    t = targets.astype(jnp.int32).reshape(-1)
    if n_pad != n:
        t = jnp.pad(t, (0, n_pad - n))
    t2d = t.reshape(n_pad, 1)

    grid = (n_pad // tn, c_pad // tc)

    partials = pl.pallas_call(
        _make_ce_kernel(n, tn, tc),
        out_shape=jax.ShapeDtypeStruct((grid[0], 8, 128), jnp.float32),
        grid_spec=pltpu.PrefetchScalarGridSpec(
            num_scalar_prefetch=0,
            grid=grid,
            in_specs=[
                # Logits stream in their native dtype; double-buffered by
                # BlockSpec auto-pipelining.
                pl.BlockSpec((tn, tc), lambda ni, ci: (ni, ci)),
                # Targets: tiny (tn, 1) i32 tile per row block.
                pl.BlockSpec((tn, 1), lambda ni, ci: (ni, 0)),
            ],
            # Output block depends only on the (parallel) N axis; it stays
            # resident across the C reduction axis and is written once.
            out_specs=pl.BlockSpec((1, 8, 128), lambda ni, ci: (ni, 0, 0)),
            scratch_shapes=[pltpu.VMEM((tn, 1), jnp.float32)] * 3,
        ),
        compiler_params=pltpu.CompilerParams(
            dimension_semantics=("parallel", "arbitrary"),
            vmem_limit_bytes=32 * 1024 * 1024,
        ),
    )(x, t2d)

    total = jnp.sum(partials[:, 0, 0])
    return total / jnp.float32(n)


def _reference_cross_entropy(logits, targets):
    logp = jax.nn.log_softmax(logits.astype(jnp.float32), axis=-1)
    picked = jnp.take_along_axis(
        logp, targets[:, None].astype(jnp.int32), axis=-1)
    return -jnp.mean(picked)


if __name__ == "__main__":
    key = jax.random.PRNGKey(0)
    k1, k2, k3, k4 = jax.random.split(key, 4)

    # Case 1: small single-block case (batch=8, classes=32), f32.
    N1, C1 = 8, 32
    logits1 = jax.random.normal(k1, (N1, C1), dtype=jnp.float32)
    targets1 = jax.random.randint(k2, (N1,), 0, C1, dtype=jnp.int32)
    loss1 = cross_entropy_loss(logits1, targets1)
    jax.block_until_ready(loss1)
    ref1 = _reference_cross_entropy(logits1, targets1)
    assert jnp.allclose(loss1, ref1, atol=1e-5, rtol=1e-5), (loss1, ref1)

    # Case 2: multi-tile case exercising the (N, C) grid, padding/masking,
    # online LSE, and native-bf16 streaming (batch=200, classes=700).
    N2, C2 = 200, 700
    logits2 = jax.random.normal(k3, (N2, C2), dtype=jnp.float32).astype(jnp.bfloat16)
    targets2 = jax.random.randint(k4, (N2,), 0, C2, dtype=jnp.int32)
    loss2 = cross_entropy_loss(logits2, targets2, tn=128, tc=256)
    jax.block_until_ready(loss2)
    ref2 = _reference_cross_entropy(logits2, targets2)
    assert jnp.allclose(loss2, ref2, atol=1e-3, rtol=1e-3), (loss2, ref2)

    print("KERNEL_OK")
</pallas_src>

<mosaic_0001>
module attributes {stable_mosaic.version = 11 : i64} {
  func.func @kernel(%arg0: i32, %arg1: i32, %arg2: memref<8x128xf32, #tpu.memory_space<vmem>>, %arg3: memref<8x1xi32, #tpu.memory_space<vmem>>, %arg4: memref<1x8x128xf32, #tpu.memory_space<vmem>>, %arg5: memref<8x1xf32, #tpu.memory_space<vmem>>, %arg6: memref<8x1xf32, #tpu.memory_space<vmem>>, %arg7: memref<8x1xf32, #tpu.memory_space<vmem>>) attributes {dimension_semantics = [#tpu.dimension_semantics<parallel>, #tpu.dimension_semantics<arbitrary>], iteration_bounds = array<i64: 1, 1>, scalar_prefetch = 0 : i64, scratch_operands = 3 : i64, tpu.core_type = #tpu.core_type<tc>, window_params = [{transform_indices = @transform_0, window_bounds = array<i64: 8, 128>}, {transform_indices = @transform_1, window_bounds = array<i64: 8, 1>}, {transform_indices = @transform_2, window_bounds = array<i64: 1, 8, 128>}]} {
    %c0_i32 = arith.constant 0 : i32
    %0 = arith.cmpi eq, %arg1, %c0_i32 : i32
    %1 = arith.extui %0 : i1 to i32
    %c0_i32_0 = arith.constant 0 : i32
    %2 = arith.cmpi ne, %1, %c0_i32_0 : i32
    scf.if %2 {
      %cst_23 = arith.constant 0xFF800000 : f32
      %38 = vector.broadcast %cst_23 : f32 to vector<8x1xf32>
      %c0_24 = arith.constant 0 : index
      %c0_25 = arith.constant 0 : index
      %39 = vector.load %arg5[%c0_24, %c0_25] : memref<8x1xf32, #tpu.memory_space<vmem>>, vector<8x1xf32>
      tpu.vector_store %arg5[%c0_24, %c0_25], %38 {strides = array<i32>} : memref<8x1xf32, #tpu.memory_space<vmem>>, vector<8x1xf32>,
      %cst_26 = arith.constant 0.000000e+00 : f32
      %40 = vector.broadcast %cst_26 : f32 to vector<8x1xf32>
      %c0_27 = arith.constant 0 : index
      %c0_28 = arith.constant 0 : index
      %41 = vector.load %arg6[%c0_27, %c0_28] : memref<8x1xf32, #tpu.memory_space<vmem>>, vector<8x1xf32>
      tpu.vector_store %arg6[%c0_27, %c0_28], %40 {strides = array<i32>} : memref<8x1xf32, #tpu.memory_space<vmem>>, vector<8x1xf32>,
      %cst_29 = arith.constant 0.000000e+00 : f32
      %42 = vector.broadcast %cst_29 : f32 to vector<8x1xf32>
      %c0_30 = arith.constant 0 : index
      %c0_31 = arith.constant 0 : index
      %43 = vector.load %arg7[%c0_30, %c0_31] : memref<8x1xf32, #tpu.memory_space<vmem>>, vector<8x1xf32>
      tpu.vector_store %arg7[%c0_30, %c0_31], %42 {strides = array<i32>} : memref<8x1xf32, #tpu.memory_space<vmem>>, vector<8x1xf32>,
    } else {
    }
    %c0 = arith.constant 0 : index
    %c0_1 = arith.constant 0 : index
    %3 = vector.load %arg2[%c0, %c0_1] : memref<8x128xf32, #tpu.memory_space<vmem>>, vector<8x128xf32>
    %c0_2 = arith.constant 0 : index
    %c0_3 = arith.constant 0 : index
    %4 = vector.load %arg3[%c0_2, %c0_3] : memref<8x1xi32, #tpu.memory_space<vmem>>, vector<8x1xi32>
    %cst = arith.constant dense<0xFF800000> : vector<8xf32>
    %5 = vector.multi_reduction <maximumf>, %3, %cst [1] : vector<8x128xf32> to vector<8xf32>
    %6 = vector.shape_cast %5 : vector<8xf32> to vector<8x1xf32>
    %c0_4 = arith.constant 0 : index
    %c0_5 = arith.constant 0 : index
    %7 = vector.load %arg5[%c0_4, %c0_5] : memref<8x1xf32, #tpu.memory_space<vmem>>, vector<8x1xf32>
    %8 = arith.maximumf %7, %6 : vector<8x1xf32>
    %c0_6 = arith.constant 0 : index
    %c0_7 = arith.constant 0 : index
    %9 = vector.load %arg5[%c0_6, %c0_7] : memref<8x1xf32, #tpu.memory_space<vmem>>, vector<8x1xf32>
    %10 = arith.subf %9, %8 : vector<8x1xf32>
    %11 = math.exp %10 : vector<8x1xf32>
    %c0_8 = arith.constant 0 : index
    %c0_9 = arith.constant 0 : index
    %12 = vector.load %arg6[%c0_8, %c0_9] : memref<8x1xf32, #tpu.memory_space<vmem>>, vector<8x1xf32>
    %13 = arith.mulf %11, %12 : vector<8x1xf32>
    %14 = vector.broadcast %8 : vector<8x1xf32> to vector<8x128xf32>
    %15 = arith.subf %3, %14 : vector<8x128xf32>
    %16 = math.exp %15 : vector<8x128xf32>
    %cst_10 = arith.constant dense<0.000000e+00> : vector<8xf32>
    %17 = vector.multi_reduction <add>, %16, %cst_10 [1] : vector<8x128xf32> to vector<8xf32>
    %18 = vector.shape_cast %17 : vector<8xf32> to vector<8x1xf32>
    %19 = arith.addf %13, %18 : vector<8x1xf32>
    %c0_11 = arith.constant 0 : index
    %c0_12 = arith.constant 0 : index
    %20 = vector.load %arg6[%c0_11, %c0_12] : memref<8x1xf32, #tpu.memory_space<vmem>>, vector<8x1xf32>
    tpu.vector_store %arg6[%c0_11, %c0_12], %19 {strides = array<i32>} : memref<8x1xf32, #tpu.memory_space<vmem>>, vector<8x1xf32>,
    %c0_13 = arith.constant 0 : index
    %c0_14 = arith.constant 0 : index
    %21 = vector.load %arg5[%c0_13, %c0_14] : memref<8x1xf32, #tpu.memory_space<vmem>>, vector<8x1xf32>
    tpu.vector_store %arg5[%c0_13, %c0_14], %8 {strides = array<i32>} : memref<8x1xf32, #tpu.memory_space<vmem>>, vector<8x1xf32>,
    %22 = tpu.iota {dimensions = array<i32: 1>} : vector<8x128xi32>
    %c128_i32 = arith.constant 128 : i32
    %23 = arith.muli %arg1, %c128_i32 : i32
    %24 = vector.broadcast %23 : i32 to vector<8x128xi32>
    %25 = arith.addi %22, %24 : vector<8x128xi32>
    %c0_15 = arith.constant 0 : index
    %c0_16 = arith.constant 0 : index
    %26 = vector.load %arg7[%c0_15, %c0_16] : memref<8x1xf32, #tpu.memory_space<vmem>>, vector<8x1xf32>
    %27 = vector.broadcast %4 : vector<8x1xi32> to vector<8x128xi32>
    %28 = arith.cmpi eq, %25, %27 : vector<8x128xi32>
    %cst_17 = arith.constant 0.000000e+00 : f32
    %29 = vector.broadcast %cst_17 : f32 to vector<8x128xf32>
    %30 = arith.select %28, %3, %29 : vector<8x128xi1>, vector<8x128xf32>
    %cst_18 = arith.constant dense<0.000000e+00> : vector<8xf32>
    %31 = vector.multi_reduction <add>, %30, %cst_18 [1] : vector<8x128xf32> to vector<8xf32>
    %32 = vector.shape_cast %31 : vector<8xf32> to vector<8x1xf32>
    %33 = arith.addf %26, %32 : vector<8x1xf32>
    %c0_19 = arith.constant 0 : index
    %c0_20 = arith.constant 0 : index
    %34 = vector.load %arg7[%c0_19, %c0_20] : memref<8x1xf32, #tpu.memory_space<vmem>>, vector<8x1xf32>
    tpu.vector_store %arg7[%c0_19, %c0_20], %33 {strides = array<i32>} : memref<8x1xf32, #tpu.memory_space<vmem>>, vector<8x1xf32>,
    %c0_i32_21 = arith.constant 0 : i32
    %35 = arith.cmpi eq, %arg1, %c0_i32_21 : i32
    %36 = arith.extui %35 : i1 to i32
    %c0_i32_22 = arith.constant 0 : i32
    %37 = arith.cmpi ne, %36, %c0_i32_22 : i32
    scf.if %37 {
      %c0_23 = arith.constant 0 : index
      %c0_24 = arith.constant 0 : index
      %38 = vector.load %arg5[%c0_23, %c0_24] : memref<8x1xf32, #tpu.memory_space<vmem>>, vector<8x1xf32>
      %c0_25 = arith.constant 0 : index
      %c0_26 = arith.constant 0 : index
      %39 = vector.load %arg6[%c0_25, %c0_26] : memref<8x1xf32, #tpu.memory_space<vmem>>, vector<8x1xf32>
      %40 = math.log %39 : vector<8x1xf32>
      %41 = arith.addf %38, %40 : vector<8x1xf32>
      %c0_27 = arith.constant 0 : index
      %c0_28 = arith.constant 0 : index
      %42 = vector.load %arg7[%c0_27, %c0_28] : memref<8x1xf32, #tpu.memory_space<vmem>>, vector<8x1xf32>
      %43 = arith.subf %41, %42 : vector<8x1xf32>
      %44 = tpu.iota {dimensions = array<i32: 0>} : vector<8x1xi32>
      %c8_i32 = arith.constant 8 : i32
      %45 = arith.muli %arg0, %c8_i32 : i32
      %46 = vector.broadcast %45 : i32 to vector<8x1xi32>
      %47 = arith.addi %44, %46 : vector<8x1xi32>
      %c8_i32_29 = arith.constant 8 : i32
      %48 = vector.broadcast %c8_i32_29 : i32 to vector<8x1xi32>
      %49 = arith.cmpi slt, %47, %48 : vector<8x1xi32>
      %cst_30 = arith.constant 0.000000e+00 : f32
      %50 = vector.broadcast %cst_30 : f32 to vector<8x1xf32>
      %51 = arith.select %49, %43, %50 : vector<8x1xi1>, vector<8x1xf32>
      %52 = vector.shape_cast %51 : vector<8x1xf32> to vector<1x8x1xf32>
      %cst_31 = arith.constant dense<0.000000e+00> : vector<1xf32>
      %53 = vector.multi_reduction <add>, %52, %cst_31 [1, 2] : vector<1x8x1xf32> to vector<1xf32>
      %54 = vector.shape_cast %53 : vector<1xf32> to vector<1x1x1xf32>
      %55 = vector.extract %54[0, 0, 0] : f32 from vector<1x1x1xf32>
      %56 = vector.broadcast %55 : f32 to vector<1x8x128xf32>
      %c0_32 = arith.constant 0 : index
      %c0_33 = arith.constant 0 : index
      %c0_34 = arith.constant 0 : index
      %57 = vector.load %arg4[%c0_32, %c0_33, %c0_34] : memref<1x8x128xf32, #tpu.memory_space<vmem>>, vector<1x8x128xf32>
      tpu.vector_store %arg4[%c0_32, %c0_33, %c0_34], %56 {strides = array<i32>} : memref<1x8x128xf32, #tpu.memory_space<vmem>>, vector<1x8x128xf32>,
    } else {
    }
    return
  }
  func.func @transform_0(%arg0: i32, %arg1: i32) -> (i32, i32) {
    %c0_i32 = arith.constant 0 : i32
    return %arg0, %arg1 : i32, i32
  }
  func.func @transform_1(%arg0: i32, %arg1: i32) -> (i32, i32) {
    %c0_i32 = arith.constant 0 : i32
    %c0_i32_0 = arith.constant 0 : i32
    return %arg0, %c0_i32 : i32, i32
  }
  func.func @transform_2(%arg0: i32, %arg1: i32) -> (i32, i32, i32) {
    %c0_i32 = arith.constant 0 : i32
    %c0_i32_0 = arith.constant 0 : i32
    %c0_i32_1 = arith.constant 0 : i32
    return %arg0, %c0_i32, %c0_i32_0 : i32, i32, i32
  }
}

</mosaic_0001>

<llo_original>
// kernel: cross_entropy_loss.1
$region0: #{cross_entropy_loss.1}
  #allocation0 [shape = 'u32[]', space=smem, size = 0x4, offset = 0x4, fixed_abs, tag = 'smem constant byte address 0x4 - core index']
  #allocation1 [shape = 'u32[144,128]{1,0:T(1,128)}', space=vmem, size = 0x12000, scoped, tag = 'internal scratch']
  #allocation2 [shape = 'f32[8,1]{1,0:T(8,128)}', space=vmem, size = 0x1000, scoped, tag = 'scratch operand']
  #allocation3 [shape = 'f32[8,1]{1,0:T(8,128)}', space=vmem, size = 0x1000, scoped, tag = 'scratch operand']
  #allocation4 [shape = 'f32[8,1]{1,0:T(8,128)}', space=vmem, size = 0x1000, scoped, tag = 'scratch operand']
  %s0 = inlined_call_operand.vmem [shape: f32[8,128], index: 0, kind: input, shape index: {}]
  %s1 = inlined_call_operand.vmem [shape: s32[8,1], index: 1, kind: input, shape index: {}]
  %s2 = inlined_call_operand.vmem [shape: f32[1,8,128], index: 2, kind: output, shape index: {}]
  %s3 = sld [smem:[#allocation0]]
  $region26: #{cross_entropy_loss.1} parent=0
    _
  %s5 = ssub.s32 1, %s3
  %s6 = scalar_select 0, %s5, %s3
  // Predicated region
  $region2: #{cross_entropy_loss.1} parent=0 // pred_check
    _
  $region3: #{cross_entropy_loss.1} parent=0 // pred_check_branch
    %8 = sbr.rel (0) target = $region5
  $region4: #{cross_entropy_loss.1} parent=0 // pred_region
    _
  $region5: #{cross_entropy_loss.1} parent=0 // pred_fallthru
    _
  // Predicated region
  $region6: #{cross_entropy_loss.1} parent=0 // pred_check
    _
  $region7: #{cross_entropy_loss.1} parent=0 // pred_check_branch
    %10 = sbr.rel (0) target = $region9
  $region8: #{cross_entropy_loss.1} parent=0 // pred_region
    _
  $region9: #{cross_entropy_loss.1} parent=0 // pred_fallthru
    _
  %p11 = scmp.eq.s32.totalorder 0, 0
  // Predicated region
  $region10: #{cross_entropy_loss.1} parent=0 // pred_check
    %p12 = pneg %p11
  $region11: #{cross_entropy_loss.1} parent=0 // pred_check_branch
    %14 = sbr.rel (%p12) target = $region13
  $region12: #{cross_entropy_loss.1} parent=0 // pred_region
    %vm15 = vcmask 7168
    %16 = vst.msk [vmem:[#allocation2] sm:$0xff] %vm15, -inf
    %17 = vst.msk [vmem:[#allocation3] sm:$0xff] %vm15, 0.0
    %18 = vst.msk [vmem:[#allocation4] sm:$0xff] %vm15, 0.0
  $region13: #{cross_entropy_loss.1} parent=0 // pred_fallthru
    _
  %v19 = vld [vmem:[%s0] sm:$0xff]
  %v20 = vld [vmem:[%s1] sm:$0xff]
  %21 = vmax.xlane.f32.xlu0 %v19
  %v22 = vpop.xlane.xlu0 %21
  %v23 = vld [vmem:[#allocation2] sm:$0xff]
  %v24 = vmax.f32 %v23, %v22
  %v25 = vsub.f32 %v23, %v24
  %v26 = vmul.f32 %v25, 1.442695
  %v27 = vpow.pop %v26
  %v28 = vld [vmem:[#allocation3] sm:$0xff]
  %v29 = vmul.f32 %v27, %v28
  %31 = vset.pattern.permute.xlu0 0
  %32 = vperm.xlu0 %31, %v24
  %v33 = vpop.permute.xlu0 %32
  %v35 = vsub.f32 %v19, %v33
  %v36 = vmul.f32 %v35, 1.442695
  %v37 = vpow.pop %v36
  %38 = vadd.xlane.f32.xlu0 %v37
  %v39 = vpop.xlane.xlu0 %38
  %v40 = vadd.f32 %v29, %v39
  %vm41 = vcmask 7168
  %42 = vst.msk [vmem:[#allocation3] sm:$0xff] %vm41, %v40
  %43 = vst.msk [vmem:[#allocation2] sm:$0xff] %vm41, %v24
  %v44 = vlaneseq
  %v45 = vand.u32 %v44, 127
  %s46 = smul.u32 0, 128
  %v47 = vstv %s46
  %v48 = vadd.s32 %v45, %v47
  %v49 = vld [vmem:[#allocation4] sm:$0xff]
  %50 = vset.pattern.permute.xlu0 0
  %51 = vperm.xlu0 %50, %v20
  %v52 = vpop.permute.xlu0 %51
  %vm53 = vcmp.eq.s32.totalorder %v48, %v52
  %v54 = vsel %vm53, %v19, 0.0
  %55 = vadd.xlane.f32.xlu0 %v54
  %v56 = vpop.xlane.xlu0 %55
  %v57 = vadd.f32 %v49, %v56
  %58 = vst.msk [vmem:[#allocation4] sm:$0xff] %vm41, %v57
  // Predicated region
  $region14: #{cross_entropy_loss.1} parent=0 // pred_check
    %p59 = pneg %p11
  $region15: #{cross_entropy_loss.1} parent=0 // pred_check_branch
    %61 = sbr.rel (%p59) target = $region17
  $region16: #{cross_entropy_loss.1} parent=0 // pred_region
    %v62 = vld [vmem:[#allocation2] sm:$0xff]
    %v63 = vld [vmem:[#allocation3] sm:$0xff]
    %v64 = vlog2.pop %v63
    %v65 = vmul.f32 %v64, 0.6931472
    %v66 = vadd.f32 %v62, %v65
    %v67 = vld [vmem:[#allocation4] sm:$0xff]
    %v68 = vsub.f32 %v66, %v67
    %v69 = vlaneseq
    %v70 = vshrl.u32 %v69, 7
    %s71 = smul.u32 0, 8
    %v72 = vstv %s71
    %v73 = vadd.s32 %v70, %v72
    %vm74 = vcmp.lt.s32.totalorder %v73, 8
    %v75 = vsel %vm74, %v68, 0.0
    %v76 = vsel %vm41, %v75, 0.0
    %77 = vadd.xlane.f32.xlu0 %v76
    %v78 = vpop.xlane.xlu0 %77
    %v79 = vrot.slane %v78, 4
    %v80 = vadd.f32 %v78, %v79
    %v81 = vrot.slane %v80, 2
    %v82 = vadd.f32 %v80, %v81
    %v83 = vrot.slane %v82, 1
    %v84 = vadd.f32 %v82, %v83
    %s85 = vtos %v84
    %v86 = vstv %s85
    %87 = vst [vmem:[%s2] sm:$0xff] %v86
  $region17: #{cross_entropy_loss.1} parent=0 // pred_fallthru
    _
  // Predicated region
  $region18: #{cross_entropy_loss.1} parent=0 // pred_check
    _
  $region19: #{cross_entropy_loss.1} parent=0 // pred_check_branch
    %89 = sbr.rel (0) target = $region21
  $region20: #{cross_entropy_loss.1} parent=0 // pred_region
    _
  $region21: #{cross_entropy_loss.1} parent=0 // pred_fallthru
    _
  // Predicated region
  $region22: #{cross_entropy_loss.1} parent=0 // pred_check
    _
  $region23: #{cross_entropy_loss.1} parent=0 // pred_check_branch
    %91 = sbr.rel (0) target = $region25
  $region24: #{cross_entropy_loss.1} parent=0 // pred_region
    _
  $region25: #{cross_entropy_loss.1} parent=0 // pred_fallthru
    _

</llo_original>
